<compile_context>
chip_gen: v7x
topology: tpu7x:2x2x1
jax: 0.10.0
libtpu: 0.0.40
codegen_flags: <defaults>
</compile_context>

<pallas_src>
import functools

import jax
import jax.numpy as jnp
import numpy as np
from jax.experimental import pallas as pl
from jax.experimental.pallas import tpu as pltpu


# ---------------------------------------------------------------------------
# Fast bounded-range sine (host-side coefficient generation).
# ---------------------------------------------------------------------------
def _sine_poly_coeffs(num_terms=7):
    """Near-minimax odd polynomial for a full sine period.

        sin(2*pi*r) ~= r * sum_k c[k] * (r*r)**k      for r in [-0.5, 0.5]

    Obtained by interpolating g(u) = sin(2*pi*sqrt(u))/sqrt(u) at Chebyshev
    nodes of u in [0, 0.25] (fit in t = 4u for conditioning).  Max abs error
    ~1e-9 in exact arithmetic, i.e. far below f32 resolution; f32 Horner
    evaluation adds a few ULP.
    """
    k = int(num_terms)
    j = np.arange(k, dtype=np.float64)
    u = 0.125 * (1.0 + np.cos((2.0 * j + 1.0) * np.pi / (2.0 * k)))   # (0, 0.25)
    g = np.sin(2.0 * np.pi * np.sqrt(u)) / np.sqrt(u)
    c_t = np.polynomial.polynomial.polyfit(4.0 * u, g, k - 1)          # t in (0,1)
    return tuple(float(c_t[i] * (4.0 ** i)) for i in range(k))


_SIN_COEFFS = _sine_poly_coeffs()
_INV_TWO_PI = 0.15915494309189535


def _fast_sin(z, coeffs):
    """sin(z) via turn-based range reduction + odd polynomial.

    SIREN pre-activations are bounded (|z| <~ 1e2 with omega folded), so a
    single-multiply range reduction is accurate to a few ULP of the argument;
    total cost ~12 VPU ops/element vs ~30-40 for the libm-style jnp.sin.
    """
    r = z * np.float32(_INV_TWO_PI)
    r = r - jnp.floor(r + np.float32(0.5))            # r in [-0.5, 0.5] turns
    u = r * r
    p = np.float32(coeffs[-1])
    for c in coeffs[-2::-1]:
        p = p * u + np.float32(c)                     # Horner on the VPU
    return r * p


# ---------------------------------------------------------------------------
# Kernel
# ---------------------------------------------------------------------------
def _siren_kernel(x_ref, w_ref, b_ref, o_ref, *, layer_dims, outermost_linear,
                  chunk_n, chunks_per_tile, sin_coeffs):
    """Whole-network forward for one point tile.

    Layout (feature-major, omega pre-folded into w/b):
      x_ref : (H, tile_n)    coords zero-padded to H features
      w_ref : (L, H, H)      layer l's (fo, fi) weight in w_ref[l, :fo, :fi]
      b_ref : (L, H, 1)
      o_ref : (out_features, tile_n)

    The layer loop runs depth-first over `chunk_n`-point lane chunks so the
    live intermediates stay in the vreg file (no spill traffic between layers).
    """
    num_layers = len(layer_dims)

    @pl.loop(0, chunks_per_tile)
    def _chunk(ci):
        start = pl.multiple_of(ci * chunk_n, chunk_n)
        h = x_ref[:, pl.ds(start, chunk_n)]                    # (H, chunk) f32
        for l, (fo, fi) in enumerate(layer_dims):
            w = w_ref[l, :fo, :fi]                             # (fo, fi)
            b = b_ref[l, :fo, :]                               # (fo, 1)
            # MXU matmul (idle unit); f32 accumulate.
            z = jnp.dot(w, h, preferred_element_type=jnp.float32) + b
            if l == num_layers - 1 and outermost_linear:
                h = z
            else:
                h = _fast_sin(z, sin_coeffs)                   # omega folded in
        o_ref[:, pl.ds(start, chunk_n)] = h.astype(o_ref.dtype)


# ---------------------------------------------------------------------------
# Wrapper
# ---------------------------------------------------------------------------
def siren_forward(coords, weights, biases, omegas, outermost_linear,
                  *, chunk_n=None):
    """Run the SIREN network with a single Pallas kernel.

    coords : (N, in_features) f32
    weights: list of (out_i, in_i) f32   (PyTorch nn.Linear convention)
    biases : list of (out_i,) f32
    Returns (output, coords) -- matching Siren.forward.
    """
    coords = jnp.asarray(coords, jnp.float32)
    N, in_features = coords.shape
    L = len(weights)
    out_features = int(weights[-1].shape[0])

    fos = [int(w.shape[0]) for w in weights]
    fis = [int(w.shape[1]) for w in weights]       # fis[0] == in_features
    H = max(fos + fis)
    H = ((H + 7) // 8) * 8                         # sublane-aligned pack width

    # --- chunk / tile / grid selection -------------------------------------
    # chunk_n: ~8K f32 elements per live (H, chunk) intermediate (~8 vregs) so
    # a depth-first chunk never spills out of the 64-entry vreg file.
    if chunk_n is None:
        chunk_n = int(min(512, max(128, 128 * (8192 // (H * 128)))))
    total_chunks = pl.cdiv(N, chunk_n)
    if total_chunks <= 1:
        grid_n, chunks_per_tile = 1, 1
    else:
        # Even grid count -> load-balances v7x's two TensorCores; tile_n capped
        # at ~4096 points keeps double-buffered blocks tiny even on v7x's
        # 64 MiB VMEM (re-budget chunk_n/tile cap if hidden grows to 256-1024).
        max_cpt = max(1, 4096 // chunk_n)
        grid_n = 2
        while pl.cdiv(total_chunks, grid_n) > max_cpt:
            grid_n += 2
        chunks_per_tile = pl.cdiv(total_chunks, grid_n)
    tile_n = chunks_per_tile * chunk_n
    n_pad = grid_n * tile_n                        # padding waste <~ one tile

    # --- layout glue: fold omega into parameters, pack into two operands ----
    w_all = jnp.zeros((L, H, H), jnp.float32)
    b_all = jnp.zeros((L, H, 1), jnp.float32)
    for l, (w, b) in enumerate(zip(weights, biases)):
        is_last = l == L - 1
        scale = 1.0 if (is_last and outermost_linear) else float(omegas[l])
        w = scale * jnp.asarray(w, jnp.float32)
        b = scale * jnp.asarray(b, jnp.float32)
        w_all = w_all.at[l, : w.shape[0], : w.shape[1]].set(w)
        b_all = b_all.at[l, : w.shape[0], 0].set(b)

    # Coords: feature-major, zero-padded to H features and n_pad points.  The
    # padded weight columns are zero, so layer 0 can use the full (H, H) tile
    # (uniform MXU matmuls; no tiny-K special case).
    coords_t = jnp.pad(coords.T, ((0, H - in_features), (0, n_pad - N)))

    # fi seen by the kernel: H for layer 0 (padded coords), else previous fo.
    layer_dims = tuple(zip(fos, [H] + fos[:-1]))

    in_specs = [
        pl.BlockSpec((H, tile_n), lambda i: (0, i)),
        pl.BlockSpec((L, H, H), lambda i: (0, 0, 0)),      # resident weights
        pl.BlockSpec((L, H, 1), lambda i: (0, 0, 0)),      # resident biases
    ]
    out_spec = pl.BlockSpec((out_features, tile_n), lambda i: (0, i))

    kernel = functools.partial(
        _siren_kernel,
        layer_dims=layer_dims,
        outermost_linear=bool(outermost_linear),
        chunk_n=chunk_n,
        chunks_per_tile=chunks_per_tile,
        sin_coeffs=_SIN_COEFFS,
    )

    # Advisory cost hint: transcendental-heavy, flop-light.
    flops = 2 * n_pad * sum(fo * fi for fo, fi in layer_dims)
    transcendentals = n_pad * sum(
        fo for l, fo in enumerate(fos)
        if not (l == L - 1 and outermost_linear))
    bytes_accessed = 4 * (H * n_pad + out_features * n_pad
                          + int(w_all.size) + int(b_all.size))

    out_t = pl.pallas_call(
        kernel,
        out_shape=jax.ShapeDtypeStruct((out_features, n_pad), jnp.float32),
        grid_spec=pltpu.PrefetchScalarGridSpec(
            num_scalar_prefetch=0,
            grid=(grid_n,),
            in_specs=in_specs,
            out_specs=out_spec,
        ),
        compiler_params=pltpu.CompilerParams(
            dimension_semantics=("parallel",),
        ),
        cost_estimate=pl.CostEstimate(
            flops=flops,
            transcendentals=transcendentals,
            bytes_accessed=bytes_accessed,
        ),
    )(coords_t, w_all, b_all)

    out = out_t[:, :N].T                            # back to (N, out_features)
    return out, coords


# ---------------------------------------------------------------------------
# Parameter init (mirrors SineLayer.init_weights / nn.Linear bias default).
# ---------------------------------------------------------------------------
def init_siren_params(key, in_features, hidden_features, hidden_layers,
                      out_features, outermost_linear=False,
                      first_omega_0=30.0, hidden_omega_0=30.0):
    dims_in = [in_features] + [hidden_features] * (hidden_layers + 1)
    dims_out = [hidden_features] * (hidden_layers + 1) + [out_features]
    weights, biases, omegas = [], [], []
    for li, (fi, fo) in enumerate(zip(dims_in, dims_out)):
        key, kw, kb = jax.random.split(key, 3)
        if li == 0:
            bound_w = 1.0 / fi
            omega = first_omega_0
        else:
            bound_w = np.sqrt(6.0 / fi) / hidden_omega_0
            omega = hidden_omega_0
        w = jax.random.uniform(kw, (fo, fi), jnp.float32, -bound_w, bound_w)
        bound_b = 1.0 / np.sqrt(fi)
        b = jax.random.uniform(kb, (fo,), jnp.float32, -bound_b, bound_b)
        weights.append(w)
        biases.append(b)
        omegas.append(omega)
    return weights, biases, omegas


def siren_reference_f64(coords, weights, biases, omegas, outermost_linear):
    """Exact-math (float64 numpy) reference of the PyTorch forward."""
    h = np.asarray(coords, np.float64)
    L = len(weights)
    for l in range(L):
        z = h @ np.asarray(weights[l], np.float64).T + np.asarray(biases[l], np.float64)
        if l == L - 1 and outermost_linear:
            h = z
        else:
            h = np.sin(float(omegas[l]) * z)
    return h


if __name__ == "__main__":
    # Small Siren: in=2 (2-D coords), hidden=32, 2 hidden layers, out=1.
    in_features = 2
    hidden_features = 32
    hidden_layers = 2
    out_features = 1
    outermost_linear = False  # PyTorch default
    first_omega_0 = 30.0
    hidden_omega_0 = 30.0

    key = jax.random.PRNGKey(0)
    key, kc = jax.random.split(key)
    # N deliberately NOT a multiple of the chunk size: pads 3000 -> 3072
    # (2.4% waste), grid of 2 tiles x 6 chunks (even split on v7x's 2 TCs).
    N = 3000
    coords = jax.random.uniform(kc, (N, in_features), jnp.float32, -1.0, 1.0)

    weights, biases, omegas = init_siren_params(
        key, in_features, hidden_features, hidden_layers, out_features,
        outermost_linear, first_omega_0, hidden_omega_0)

    out, coords_out = siren_forward(coords, weights, biases, omegas,
                                    outermost_linear)
    out = jax.block_until_ready(out)

    # Tolerance note: with omega=30 folded in, first-layer sine arguments reach
    # ~50 rad, so ANY f32 forward (PyTorch included) carries ~1e-5..1e-4 of
    # argument error through the sines after layer-to-layer amplification.
    # We therefore compare against an exact float64 reference at 1e-3.
    ref = siren_reference_f64(np.asarray(coords),
                              [np.asarray(w) for w in weights],
                              [np.asarray(b) for b in biases],
                              omegas, outermost_linear)
    np.testing.assert_allclose(np.asarray(out, np.float64), ref,
                               rtol=1e-3, atol=1e-3)
    assert out.shape == (N, out_features)
    assert coords_out.shape == coords.shape

    print("KERNEL_OK")
</pallas_src>

<mosaic_0001>
module attributes {stable_mosaic.version = 11 : i64} {
  func.func @_siren_kernel(%arg0: i32, %arg1: memref<32x1536xf32, #tpu.memory_space<vmem>>, %arg2: memref<4x32x32xf32, #tpu.memory_space<vmem>>, %arg3: memref<4x32x1xf32, #tpu.memory_space<vmem>>, %arg4: memref<1x1536xf32, #tpu.memory_space<vmem>>) attributes {dimension_semantics = [#tpu.dimension_semantics<parallel>], iteration_bounds = array<i64: 2>, scalar_prefetch = 0 : i64, scratch_operands = 0 : i64, tpu.core_type = #tpu.core_type<tc>, window_params = [{transform_indices = @transform_0, window_bounds = array<i64: 32, 1536>}, {pipeline_mode = #tpu.pipeline_mode<synchronous>, transform_indices = @transform_1, window_bounds = array<i64: 4, 32, 32>}, {pipeline_mode = #tpu.pipeline_mode<synchronous>, transform_indices = @transform_2, window_bounds = array<i64: 4, 32, 1>}, {transform_indices = @transform_3, window_bounds = array<i64: 1, 1536>}]} {
    %c0_i32 = arith.constant 0 : i32
    %c6_i32 = arith.constant 6 : i32
    %0 = arith.addi %c0_i32, %c6_i32 : i32
    %c1_i32 = arith.constant 1 : i32
    scf.for %arg5 = %c0_i32 to %0 step %c1_i32  : i32 {
      %c1_i32_1 = arith.constant 1 : i32
      %1 = arith.muli %arg5, %c1_i32_1 : i32
      %c0_i32_2 = arith.constant 0 : i32
      %2 = arith.addi %c0_i32_2, %1 : i32
      %c256_i32 = arith.constant 256 : i32
      %3 = arith.muli %2, %c256_i32 : i32
      %4 = tpu.assume_multiple %3, 256 : i32
      %c0 = arith.constant 0 : index
      %5 = arith.index_cast %4 : i32 to index
      %6 = vector.load %arg1[%c0, %5] : memref<32x1536xf32, #tpu.memory_space<vmem>>, vector<32x256xf32>
      %c0_3 = arith.constant 0 : index
      %c0_4 = arith.constant 0 : index
      %c0_5 = arith.constant 0 : index
      %7 = vector.load %arg2[%c0_3, %c0_4, %c0_5] : memref<4x32x32xf32, #tpu.memory_space<vmem>>, vector<1x32x32xf32>
      %8 = vector.shape_cast %7 : vector<1x32x32xf32> to vector<32x32xf32>
      %c0_6 = arith.constant 0 : index
      %c0_7 = arith.constant 0 : index
      %c0_8 = arith.constant 0 : index
      %9 = vector.load %arg3[%c0_6, %c0_7, %c0_8] : memref<4x32x1xf32, #tpu.memory_space<vmem>>, vector<1x32x1xf32>
      %10 = vector.shape_cast %9 : vector<1x32x1xf32> to vector<32x1xf32>
      %cst = arith.constant dense<0.000000e+00> : vector<32x256xf32>
      %11 = tpu.matmul %8, %6, %cst {dimension_numbers = #tpu.dot_dimension_numbers<[1], [0], [0], [1], [0, 0, 1, 1], [], []>} : vector<32x32xf32>, vector<32x256xf32>, vector<32x256xf32> -> vector<32x256xf32>
      %12 = vector.broadcast %10 : vector<32x1xf32> to vector<32x256xf32>
      %13 = arith.addf %11, %12 : vector<32x256xf32>
      %cst_9 = arith.constant 0.159154937 : f32
      %14 = vector.broadcast %cst_9 : f32 to vector<32x256xf32>
      %15 = arith.mulf %13, %14 : vector<32x256xf32>
      %cst_10 = arith.constant 5.000000e-01 : f32
      %16 = vector.broadcast %cst_10 : f32 to vector<32x256xf32>
      %17 = arith.addf %15, %16 : vector<32x256xf32>
      %18 = math.floor %17 : vector<32x256xf32>
      %19 = arith.subf %15, %18 : vector<32x256xf32>
      %20 = arith.mulf %19, %19 : vector<32x256xf32>
      %cst_11 = arith.constant 3.237780e+00 : f32
      %21 = vector.broadcast %cst_11 : f32 to vector<32x256xf32>
      %22 = arith.mulf %21, %20 : vector<32x256xf32>
      %cst_12 = arith.constant -14.8995781 : f32
      %23 = vector.broadcast %cst_12 : f32 to vector<32x256xf32>
      %24 = arith.addf %22, %23 : vector<32x256xf32>
      %25 = arith.mulf %24, %20 : vector<32x256xf32>
      %cst_13 = arith.constant 42.0258522 : f32
      %26 = vector.broadcast %cst_13 : f32 to vector<32x256xf32>
      %27 = arith.addf %25, %26 : vector<32x256xf32>
      %28 = arith.mulf %27, %20 : vector<32x256xf32>
      %cst_14 = arith.constant -7.670300e+01 : f32
      %29 = vector.broadcast %cst_14 : f32 to vector<32x256xf32>
      %30 = arith.addf %28, %29 : vector<32x256xf32>
      %31 = arith.mulf %30, %20 : vector<32x256xf32>
      %cst_15 = arith.constant 81.605133 : f32
      %32 = vector.broadcast %cst_15 : f32 to vector<32x256xf32>
      %33 = arith.addf %31, %32 : vector<32x256xf32>
      %34 = arith.mulf %33, %20 : vector<32x256xf32>
      %cst_16 = arith.constant -4.134170e+01 : f32
      %35 = vector.broadcast %cst_16 : f32 to vector<32x256xf32>
      %36 = arith.addf %34, %35 : vector<32x256xf32>
      %37 = arith.mulf %36, %20 : vector<32x256xf32>
      %cst_17 = arith.constant 6.28318548 : f32
      %38 = vector.broadcast %cst_17 : f32 to vector<32x256xf32>
      %39 = arith.addf %37, %38 : vector<32x256xf32>
      %40 = arith.mulf %19, %39 : vector<32x256xf32>
      %c1 = arith.constant 1 : index
      %c0_18 = arith.constant 0 : index
      %c0_19 = arith.constant 0 : index
      %41 = vector.load %arg2[%c1, %c0_18, %c0_19] : memref<4x32x32xf32, #tpu.memory_space<vmem>>, vector<1x32x32xf32>
      %42 = vector.shape_cast %41 : vector<1x32x32xf32> to vector<32x32xf32>
      %c1_20 = arith.constant 1 : index
      %c0_21 = arith.constant 0 : index
      %c0_22 = arith.constant 0 : index
      %43 = vector.load %arg3[%c1_20, %c0_21, %c0_22] : memref<4x32x1xf32, #tpu.memory_space<vmem>>, vector<1x32x1xf32>
      %44 = vector.shape_cast %43 : vector<1x32x1xf32> to vector<32x1xf32>
      %cst_23 = arith.constant dense<0.000000e+00> : vector<32x256xf32>
      %45 = tpu.matmul %42, %40, %cst_23 {dimension_numbers = #tpu.dot_dimension_numbers<[1], [0], [0], [1], [0, 0, 1, 1], [], []>} : vector<32x32xf32>, vector<32x256xf32>, vector<32x256xf32> -> vector<32x256xf32>
      %46 = vector.broadcast %44 : vector<32x1xf32> to vector<32x256xf32>
      %47 = arith.addf %45, %46 : vector<32x256xf32>
      %cst_24 = arith.constant 0.159154937 : f32
      %48 = vector.broadcast %cst_24 : f32 to vector<32x256xf32>
      %49 = arith.mulf %47, %48 : vector<32x256xf32>
      %cst_25 = arith.constant 5.000000e-01 : f32
      %50 = vector.broadcast %cst_25 : f32 to vector<32x256xf32>
      %51 = arith.addf %49, %50 : vector<32x256xf32>
      %52 = math.floor %51 : vector<32x256xf32>
      %53 = arith.subf %49, %52 : vector<32x256xf32>
      %54 = arith.mulf %53, %53 : vector<32x256xf32>
      %cst_26 = arith.constant 3.237780e+00 : f32
      %55 = vector.broadcast %cst_26 : f32 to vector<32x256xf32>
      %56 = arith.mulf %55, %54 : vector<32x256xf32>
      %cst_27 = arith.constant -14.8995781 : f32
      %57 = vector.broadcast %cst_27 : f32 to vector<32x256xf32>
      %58 = arith.addf %56, %57 : vector<32x256xf32>
      %59 = arith.mulf %58, %54 : vector<32x256xf32>
      %cst_28 = arith.constant 42.0258522 : f32
      %60 = vector.broadcast %cst_28 : f32 to vector<32x256xf32>
      %61 = arith.addf %59, %60 : vector<32x256xf32>
      %62 = arith.mulf %61, %54 : vector<32x256xf32>
      %cst_29 = arith.constant -7.670300e+01 : f32
      %63 = vector.broadcast %cst_29 : f32 to vector<32x256xf32>
      %64 = arith.addf %62, %63 : vector<32x256xf32>
      %65 = arith.mulf %64, %54 : vector<32x256xf32>
      %cst_30 = arith.constant 81.605133 : f32
      %66 = vector.broadcast %cst_30 : f32 to vector<32x256xf32>
      %67 = arith.addf %65, %66 : vector<32x256xf32>
      %68 = arith.mulf %67, %54 : vector<32x256xf32>
      %cst_31 = arith.constant -4.134170e+01 : f32
      %69 = vector.broadcast %cst_31 : f32 to vector<32x256xf32>
      %70 = arith.addf %68, %69 : vector<32x256xf32>
      %71 = arith.mulf %70, %54 : vector<32x256xf32>
      %cst_32 = arith.constant 6.28318548 : f32
      %72 = vector.broadcast %cst_32 : f32 to vector<32x256xf32>
      %73 = arith.addf %71, %72 : vector<32x256xf32>
      %74 = arith.mulf %53, %73 : vector<32x256xf32>
      %c2 = arith.constant 2 : index
      %c0_33 = arith.constant 0 : index
      %c0_34 = arith.constant 0 : index
      %75 = vector.load %arg2[%c2, %c0_33, %c0_34] : memref<4x32x32xf32, #tpu.memory_space<vmem>>, vector<1x32x32xf32>
      %76 = vector.shape_cast %75 : vector<1x32x32xf32> to vector<32x32xf32>
      %c2_35 = arith.constant 2 : index
      %c0_36 = arith.constant 0 : index
      %c0_37 = arith.constant 0 : index
      %77 = vector.load %arg3[%c2_35, %c0_36, %c0_37] : memref<4x32x1xf32, #tpu.memory_space<vmem>>, vector<1x32x1xf32>
      %78 = vector.shape_cast %77 : vector<1x32x1xf32> to vector<32x1xf32>
      %cst_38 = arith.constant dense<0.000000e+00> : vector<32x256xf32>
      %79 = tpu.matmul %76, %74, %cst_38 {dimension_numbers = #tpu.dot_dimension_numbers<[1], [0], [0], [1], [0, 0, 1, 1], [], []>} : vector<32x32xf32>, vector<32x256xf32>, vector<32x256xf32> -> vector<32x256xf32>
      %80 = vector.broadcast %78 : vector<32x1xf32> to vector<32x256xf32>
      %81 = arith.addf %79, %80 : vector<32x256xf32>
      %cst_39 = arith.constant 0.159154937 : f32
      %82 = vector.broadcast %cst_39 : f32 to vector<32x256xf32>
      %83 = arith.mulf %81, %82 : vector<32x256xf32>
      %cst_40 = arith.constant 5.000000e-01 : f32
      %84 = vector.broadcast %cst_40 : f32 to vector<32x256xf32>
      %85 = arith.addf %83, %84 : vector<32x256xf32>
      %86 = math.floor %85 : vector<32x256xf32>
      %87 = arith.subf %83, %86 : vector<32x256xf32>
      %88 = arith.mulf %87, %87 : vector<32x256xf32>
      %cst_41 = arith.constant 3.237780e+00 : f32
      %89 = vector.broadcast %cst_41 : f32 to vector<32x256xf32>
      %90 = arith.mulf %89, %88 : vector<32x256xf32>
      %cst_42 = arith.constant -14.8995781 : f32
      %91 = vector.broadcast %cst_42 : f32 to vector<32x256xf32>
      %92 = arith.addf %90, %91 : vector<32x256xf32>
      %93 = arith.mulf %92, %88 : vector<32x256xf32>
      %cst_43 = arith.constant 42.0258522 : f32
      %94 = vector.broadcast %cst_43 : f32 to vector<32x256xf32>
      %95 = arith.addf %93, %94 : vector<32x256xf32>
      %96 = arith.mulf %95, %88 : vector<32x256xf32>
      %cst_44 = arith.constant -7.670300e+01 : f32
      %97 = vector.broadcast %cst_44 : f32 to vector<32x256xf32>
      %98 = arith.addf %96, %97 : vector<32x256xf32>
      %99 = arith.mulf %98, %88 : vector<32x256xf32>
      %cst_45 = arith.constant 81.605133 : f32
      %100 = vector.broadcast %cst_45 : f32 to vector<32x256xf32>
      %101 = arith.addf %99, %100 : vector<32x256xf32>
      %102 = arith.mulf %101, %88 : vector<32x256xf32>
      %cst_46 = arith.constant -4.134170e+01 : f32
      %103 = vector.broadcast %cst_46 : f32 to vector<32x256xf32>
      %104 = arith.addf %102, %103 : vector<32x256xf32>
      %105 = arith.mulf %104, %88 : vector<32x256xf32>
      %cst_47 = arith.constant 6.28318548 : f32
      %106 = vector.broadcast %cst_47 : f32 to vector<32x256xf32>
      %107 = arith.addf %105, %106 : vector<32x256xf32>
      %108 = arith.mulf %87, %107 : vector<32x256xf32>
      %c3 = arith.constant 3 : index
      %c0_48 = arith.constant 0 : index
      %c0_49 = arith.constant 0 : index
      %109 = vector.load %arg2[%c3, %c0_48, %c0_49] : memref<4x32x32xf32, #tpu.memory_space<vmem>>, vector<1x1x32xf32>
      %110 = vector.shape_cast %109 : vector<1x1x32xf32> to vector<1x32xf32>
      %c3_50 = arith.constant 3 : index
      %c0_51 = arith.constant 0 : index
      %c0_52 = arith.constant 0 : index
      %111 = vector.load %arg3[%c3_50, %c0_51, %c0_52] : memref<4x32x1xf32, #tpu.memory_space<vmem>>, vector<1x1x1xf32>
      %112 = vector.shape_cast %111 : vector<1x1x1xf32> to vector<1x1xf32>
      %cst_53 = arith.constant dense<0.000000e+00> : vector<1x256xf32>
      %113 = tpu.matmul %110, %108, %cst_53 {dimension_numbers = #tpu.dot_dimension_numbers<[1], [0], [0], [1], [0, 0, 1, 1], [], []>} : vector<1x32xf32>, vector<32x256xf32>, vector<1x256xf32> -> vector<1x256xf32>
      %114 = vector.broadcast %112 : vector<1x1xf32> to vector<1x256xf32>
      %115 = arith.addf %113, %114 : vector<1x256xf32>
      %cst_54 = arith.constant 0.159154937 : f32
      %116 = vector.broadcast %cst_54 : f32 to vector<1x256xf32>
      %117 = arith.mulf %115, %116 : vector<1x256xf32>
      %cst_55 = arith.constant 5.000000e-01 : f32
      %118 = vector.broadcast %cst_55 : f32 to vector<1x256xf32>
      %119 = arith.addf %117, %118 : vector<1x256xf32>
      %120 = math.floor %119 : vector<1x256xf32>
      %121 = arith.subf %117, %120 : vector<1x256xf32>
      %122 = arith.mulf %121, %121 : vector<1x256xf32>
      %cst_56 = arith.constant 3.237780e+00 : f32
      %123 = vector.broadcast %cst_56 : f32 to vector<1x256xf32>
      %124 = arith.mulf %123, %122 : vector<1x256xf32>
      %cst_57 = arith.constant -14.8995781 : f32
      %125 = vector.broadcast %cst_57 : f32 to vector<1x256xf32>
      %126 = arith.addf %124, %125 : vector<1x256xf32>
      %127 = arith.mulf %126, %122 : vector<1x256xf32>
      %cst_58 = arith.constant 42.0258522 : f32
      %128 = vector.broadcast %cst_58 : f32 to vector<1x256xf32>
      %129 = arith.addf %127, %128 : vector<1x256xf32>
      %130 = arith.mulf %129, %122 : vector<1x256xf32>
      %cst_59 = arith.constant -7.670300e+01 : f32
      %131 = vector.broadcast %cst_59 : f32 to vector<1x256xf32>
      %132 = arith.addf %130, %131 : vector<1x256xf32>
      %133 = arith.mulf %132, %122 : vector<1x256xf32>
      %cst_60 = arith.constant 81.605133 : f32
      %134 = vector.broadcast %cst_60 : f32 to vector<1x256xf32>
      %135 = arith.addf %133, %134 : vector<1x256xf32>
      %136 = arith.mulf %135, %122 : vector<1x256xf32>
      %cst_61 = arith.constant -4.134170e+01 : f32
      %137 = vector.broadcast %cst_61 : f32 to vector<1x256xf32>
      %138 = arith.addf %136, %137 : vector<1x256xf32>
      %139 = arith.mulf %138, %122 : vector<1x256xf32>
      %cst_62 = arith.constant 6.28318548 : f32
      %140 = vector.broadcast %cst_62 : f32 to vector<1x256xf32>
      %141 = arith.addf %139, %140 : vector<1x256xf32>
      %142 = arith.mulf %121, %141 : vector<1x256xf32>
      %c0_63 = arith.constant 0 : index
      %143 = arith.index_cast %4 : i32 to index
      %144 = vector.load %arg4[%c0_63, %143] : memref<1x1536xf32, #tpu.memory_space<vmem>>, vector<1x256xf32>
      tpu.vector_store %arg4[%c0_63, %143], %142 {strides = array<i32>} : memref<1x1536xf32, #tpu.memory_space<vmem>>, vector<1x256xf32>,
    }
    %c6_i32_0 = arith.constant 6 : i32
    return
  }
  func.func @transform_0(%arg0: i32) -> (i32, i32) {
    %c0_i32 = arith.constant 0 : i32
    %c0_i32_0 = arith.constant 0 : i32
    return %c0_i32, %arg0 : i32, i32
  }
  func.func @transform_1(%arg0: i32) -> (i32, i32, i32) {
    %c0_i32 = arith.constant 0 : i32
    %c0_i32_0 = arith.constant 0 : i32
    %c0_i32_1 = arith.constant 0 : i32
    %c0_i32_2 = arith.constant 0 : i32
    return %c0_i32, %c0_i32_0, %c0_i32_1 : i32, i32, i32
  }
  func.func @transform_2(%arg0: i32) -> (i32, i32, i32) {
    %c0_i32 = arith.constant 0 : i32
    %c0_i32_0 = arith.constant 0 : i32
    %c0_i32_1 = arith.constant 0 : i32
    %c0_i32_2 = arith.constant 0 : i32
    return %c0_i32, %c0_i32_0, %c0_i32_1 : i32, i32, i32
  }
  func.func @transform_3(%arg0: i32) -> (i32, i32) {
    %c0_i32 = arith.constant 0 : i32
    %c0_i32_0 = arith.constant 0 : i32
    return %c0_i32, %arg0 : i32, i32
  }
}

</mosaic_0001>

<llo_original>
// kernel: tpu_custom_call.1
$region0: #{tpu_custom_call.1}
  #allocation0 [shape = 'u32[]', space=smem, size = 0x4, offset = 0x4, fixed_abs, tag = 'smem constant byte address 0x4 - core index']
  #allocation1 [shape = 'u32[144,128]{1,0:T(1,128)}', space=vmem, size = 0x12000, scoped, tag = 'internal scratch']
  %s0 = inlined_call_operand.hbm [shape: f32[32,3072], index: 0, kind: input, shape index: {}]
  %s1 = inlined_call_operand.vmem [shape: f32[4,32,32], index: 1, kind: input, shape index: {}]
  %s2 = inlined_call_operand.vmem [shape: f32[4,32,1], index: 2, kind: input, shape index: {}]
  %s3 = inlined_call_operand.hbm [shape: f32[1,3072], index: 3, kind: output, shape index: {}]
  %s4 = sld [smem:[#allocation0]]
  $region56: #{tpu_custom_call.1} parent=0
    _
  %s6 = ssub.s32 1, %s4
  %s7 = scalar_select 0, %s6, %s4
  $region1: #{tpu_custom_call.1} parent=0
    #allocation2 [shape = 'u8[393216]{0}', space=vmem, size = 0x60000, scoped, tag = 'input window, operand 0']
    #allocation3 [shape = 's32[2]{0}', space=sflag, size = 0x8, scoped, tag = 'scoped memory for tpu_custom_call.1']
    #allocation4 [shape = 's32[2]{0}', space=sflag, size = 0x8, scoped, tag = 'scoped memory for tpu_custom_call.1']
    #allocation5 [shape = 'u8[12288]{0}', space=vmem, size = 0x3000, scoped, tag = 'output window, operand 0']
    %8 = vsyncpa [#allocation3], 0
    %s9 = scalar_lea.sflag [#allocation3], 1
    %10 = vsyncpa %s9, 0
    %11 = vsyncpa [#allocation4], 0
    %s12 = scalar_lea.sflag [#allocation4], 1
    %13 = vsyncpa %s12, 0
    loop: start=0, step=1, limit=4
    $region2: #{tpu_custom_call.1} parent=1 // loop_pre_header
      _
    $region3: #{tpu_custom_call.1} parent=1 // loop_header
      %s15 = sphi 0, %s19
      %p16 = scmp.ge.s32.totalorder %s15, 4
      %s25 = sphi 0, %s27
      %s28 = sphi 0, %s25
      %s29 = sphi 0, %s28
      %s45 = sphi 0, %s29
      %s49 = sphi 0, %s49
      %s51 = sphi 0, %s49
      %s52 = sphi 0, %s51
      %s66 = sphi 0, %s52
      %s70 = sphi 0, %s70
      %s72 = sphi 0, %s70
      %s73 = sphi 0, %s72
      %s87 = sphi 0, %s73
      %s93 = sphi 0, %s95
      %s96 = sphi 0, %s93
      %s97 = sphi 0, %s96
      %s113 = sphi 0, %s97
    $region4: #{tpu_custom_call.1} parent=1 // loop_header_branch
      %18 = sbr.rel (%p16) target = $region8
    $region5: #{tpu_custom_call.1} parent=1 // loop_body
      %s20 = ssub.s32 %s15, 1
      %s21 = ssub.s32 %s15, 2
      %s22 = sadd.s32 %s15, 1
      %s23 = ssub.s32 %s15, %s22
      %p24 = scmp.eq.s32.totalorder %s23, 0
      %s26 = sadd.s32 %s25, 1
      %s27 = scalar_select %p24, %s25, %s26
      %p30 = pneg %p24
      %p31 = scmp.eq.s32.totalorder %s15, 1
      %p32 = por %p30, %p31
      %p33 = scmp.ne.s32.totalorder %s25, %s28
      %p34 = scmp.eq.s32.totalorder %s15, 0
      %p35 = por %p33, %p34
      %p36 = scmp.ne.s32.totalorder %s25, %s28
      %p37 = scmp.eq.s32.totalorder %s20, 1
      %p38 = por %p36, %p37
      %p39 = scmp.ne.s32.totalorder %s28, %s29
      %p40 = scmp.eq.s32.totalorder %s20, 0
      %p41 = por %p39, %p40
      %p42 = scmp.ne.s32.totalorder %s28, %s29
      %p43 = scmp.eq.s32.totalorder %s21, 1
      %p44 = por %p42, %p43
      %p46 = scmp.ne.s32.totalorder %s29, %s45
      %p47 = scmp.eq.s32.totalorder %s21, 0
      %p48 = por %p46, %p47
      %s50 = sadd.s32 %s49, 1
      %p53 = scmp.eq.s32.totalorder %s15, 1
      %p54 = scmp.ne.s32.totalorder %s49, %s51
      %p55 = scmp.eq.s32.totalorder %s15, 0
      %p56 = por %p54, %p55
      %p57 = scmp.ne.s32.totalorder %s49, %s51
      %p58 = scmp.eq.s32.totalorder %s20, 1
      %p59 = por %p57, %p58
      %p60 = scmp.ne.s32.totalorder %s51, %s52
      %p61 = scmp.eq.s32.totalorder %s20, 0
      %p62 = por %p60, %p61
      %p63 = scmp.ne.s32.totalorder %s51, %s52
      %p64 = scmp.eq.s32.totalorder %s21, 1
      %p65 = por %p63, %p64
      %p67 = scmp.ne.s32.totalorder %s52, %s66
      %p68 = scmp.eq.s32.totalorder %s21, 0
      %p69 = por %p67, %p68
      %s71 = sadd.s32 %s70, 1
      %p74 = scmp.eq.s32.totalorder %s15, 1
      %p75 = scmp.ne.s32.totalorder %s70, %s72
      %p76 = scmp.eq.s32.totalorder %s15, 0
      %p77 = por %p75, %p76
      %p78 = scmp.ne.s32.totalorder %s70, %s72
      %p79 = scmp.eq.s32.totalorder %s20, 1
      %p80 = por %p78, %p79
      %p81 = scmp.ne.s32.totalorder %s72, %s73
      %p82 = scmp.eq.s32.totalorder %s20, 0
      %p83 = por %p81, %p82
      %p84 = scmp.ne.s32.totalorder %s72, %s73
      %p85 = scmp.eq.s32.totalorder %s21, 1
      %p86 = por %p84, %p85
      %p88 = scmp.ne.s32.totalorder %s73, %s87
      %p89 = scmp.eq.s32.totalorder %s21, 0
      %p90 = por %p88, %p89
      %s91 = ssub.s32 %s15, %s22
      %p92 = scmp.eq.s32.totalorder %s91, 0
      %s94 = sadd.s32 %s93, 1
      %s95 = scalar_select %p92, %s93, %s94
      %p98 = pneg %p92
      %p99 = scmp.eq.s32.totalorder %s15, 1
      %p100 = por %p98, %p99
      %p101 = scmp.ne.s32.totalorder %s93, %s96
      %p102 = scmp.eq.s32.totalorder %s15, 0
      %p103 = por %p101, %p102
      %p104 = scmp.ne.s32.totalorder %s93, %s96
      %p105 = scmp.eq.s32.totalorder %s20, 1
      %p106 = por %p104, %p105
      %p107 = scmp.ne.s32.totalorder %s96, %s97
      %p108 = scmp.eq.s32.totalorder %s20, 0
      %p109 = por %p107, %p108
      %p110 = scmp.ne.s32.totalorder %s96, %s97
      %p111 = scmp.eq.s32.totalorder %s21, 1
      %p112 = por %p110, %p111
      %p114 = scmp.ne.s32.totalorder %s97, %s113
      %p115 = scmp.eq.s32.totalorder %s21, 0
      %p116 = por %p114, %p115
      %p117 = scmp.le.s32.totalorder 1, %s15
      %p118 = scmp.lt.s32.totalorder %s15, 3
      %p119 = pnand %p117, %p118
      %p120 = pneg %p119
      // Predicated region
      $region9: #{tpu_custom_call.1} parent=5 // pred_check
        _
      $region10: #{tpu_custom_call.1} parent=5 // pred_check_branch
        %122 = sbr.rel (%p119) target = $region12
      $region11: #{tpu_custom_call.1} parent=5 // pred_region
        %s123 = ssub.s32 %s15, 1
        // Predicated region
        $region13: #{tpu_custom_call.1} parent=11 // pred_check
          %p124 = pneg %p62
        $region14: #{tpu_custom_call.1} parent=11 // pred_check_branch
          %126 = sbr.rel (%p124) target = $region16
        $region15: #{tpu_custom_call.1} parent=11 // pred_region
          _
        $region16: #{tpu_custom_call.1} parent=11 // pred_fallthru
          _
        // Predicated region
        $region17: #{tpu_custom_call.1} parent=11 // pred_check
          %p127 = pneg %p83
        $region18: #{tpu_custom_call.1} parent=11 // pred_check_branch
          %129 = sbr.rel (%p127) target = $region20
        $region19: #{tpu_custom_call.1} parent=11 // pred_region
          _
        $region20: #{tpu_custom_call.1} parent=11 // pred_fallthru
          _
      $region12: #{tpu_custom_call.1} parent=5 // pred_fallthru
        _
      %p130 = scmp.lt.s32.totalorder %s15, 2
      // Predicated region
      $region21: #{tpu_custom_call.1} parent=5 // pred_check
        %p131 = pneg %p130
      $region22: #{tpu_custom_call.1} parent=5 // pred_check_branch
        %133 = sbr.rel (%p131) target = $region24
      $region23: #{tpu_custom_call.1} parent=5 // pred_region
        // Predicated region
        $region25: #{tpu_custom_call.1} parent=23 // pred_check
          %p134 = pneg %p35
        $region26: #{tpu_custom_call.1} parent=23 // pred_check_branch
          %136 = sbr.rel (%p134) target = $region28
        $region27: #{tpu_custom_call.1} parent=23 // pred_region
          %s137 = sand.u32 %s25, 1
          %s138 = scalar_lea.sflag [#allocation3], %s137
          %s139 = sand.u32 %s25, 1
          %s140 = smul.addr %s139, 384
          %s141 = scalar_lea.vmem [#allocation2], %s140
          %s142 = smul.u32 12, %s15
          %s144 = ssub.s32 6144, 6144
          %145 = vsyncadd %s138, %s144
          %s146 = smul.addr %s142, 128
          %s147 = scalar_lea.hbm %s0, %s146
          %s148 = sshll.u32 %s141, 4
          %s149 = int_to_ptr.vmem [resolvable:$true] %s148
          %154 = dma.hbm_to_vmem [thread:$0]  %s147, 6144, %s149, %s138, 3072, 1536, 96
        $region28: #{tpu_custom_call.1} parent=23 // pred_fallthru
          _
      $region24: #{tpu_custom_call.1} parent=5 // pred_fallthru
        _
      %p155 = scmp.le.s32.totalorder 1, %s15
      %p156 = scmp.lt.s32.totalorder %s15, 3
      %p157 = pnand %p155, %p156
      %p158 = pneg %p157
      // Predicated region
      $region29: #{tpu_custom_call.1} parent=5 // pred_check
        _
      $region30: #{tpu_custom_call.1} parent=5 // pred_check_branch
        %160 = sbr.rel (%p157) target = $region32
      $region31: #{tpu_custom_call.1} parent=5 // pred_region
        %s161 = ssub.s32 %s15, 1
        %s162 = sand.u32 %s28, 1
        %s163 = scalar_lea.sflag [#allocation3], %s162
        %s164 = sand.u32 %s28, 1
        %s165 = smul.addr %s164, 384
        %s166 = scalar_lea.vmem [#allocation2], %s165
        // Predicated region
        $region33: #{tpu_custom_call.1} parent=31 // pred_check
          %p167 = pneg %p41
        $region34: #{tpu_custom_call.1} parent=31 // pred_check_branch
          %169 = sbr.rel (%p167) target = $region36
        $region35: #{tpu_custom_call.1} parent=31 // pred_region
          %170 = dma.done %s163, 6144
        $region36: #{tpu_custom_call.1} parent=31 // pred_fallthru
          _
        %s171 = sand.u32 %s28, 1
        %s172 = scalar_lea.sflag [#allocation3], %s171
        %s173 = sand.u32 %s28, 1
        %s174 = smul.addr %s173, 384
        %s175 = scalar_lea.vmem [#allocation2], %s174
        %p176 = pneg %p41
        %p177 = pneg %p38
        %p178 = pneg %p62
        %p179 = pneg %p59
        %p180 = pneg %p83
        %p181 = pneg %p80
        %p182 = pneg %p109
        %p183 = pneg %p106
        %s184 = sand.u32 %s96, 1
        %s185 = scalar_lea.sflag [#allocation4], %s184
        %s186 = sand.u32 %s96, 1
        %s187 = smul.addr %s186, 12
        %s188 = scalar_lea.vmem [#allocation5], %s187
        %s189 = smul.u32 12, %s20
        %s190 = smul.u32 12, %s20
        loop: start=0, step=1, limit=6
        $region37: #{tpu_custom_call.1} parent=31 // loop_pre_header
          _
        $region38: #{tpu_custom_call.1} parent=31 // loop_header
          %s192 = sphi 0, %s196
          %p193 = scmp.ge.s32.totalorder %s192, 6
        $region39: #{tpu_custom_call.1} parent=31 // loop_header_branch
          %195 = sbr.rel (%p193) target = $region43
        $region40: #{tpu_custom_call.1} parent=31 // loop_body
          %s197 = smul.u32 %s192, 256
          %s198 = sshra.s32 %s197, 7
          %s199 = sand.u32 %s197, 127
          %s200 = smul.addr %s198, 8
          %s201 = scalar_lea.vmem %s166, %s200 [#allocation2]
          %v202 = vld [vmem:[%s201] sm:$0xff]
          %v203 = vld [vmem:[%s201 + $0x8] sm:$0xff]
          %v204 = vld [vmem:[%s201 + $0x60] sm:$0xff]
          %v205 = vld [vmem:[%s201 + $0x68] sm:$0xff]
          %v206 = vld [vmem:[%s201 + $0xc0] sm:$0xff]
          %v207 = vld [vmem:[%s201 + $0xc8] sm:$0xff]
          %v208 = vld [vmem:[%s201 + $0x120] sm:$0xff]
          %v209 = vld [vmem:[%s201 + $0x128] sm:$0xff]
          %v210 = vld [vmem:[%s1] sm:$0xff]
          %v211 = vld [vmem:[%s1 + $0x8] sm:$0xff]
          %v212 = vld [vmem:[%s1 + $0x10] sm:$0xff]
          %v213 = vld [vmem:[%s1 + $0x18] sm:$0xff]
          %v214 = vld [vmem:[%s2] sm:$0xff]
          %v215 = vld [vmem:[%s2 + $0x8] sm:$0xff]
          %v216 = vld [vmem:[%s2 + $0x10] sm:$0xff]
          %v217 = vld [vmem:[%s2 + $0x18] sm:$0xff]
          %219 = vset.pattern.permute.xlu0 0
          %220 = vperm.xlu0 %219, %v214
          %v221 = vpop.permute.xlu0 %220
          %224 = vset.pattern.permute.xlu0 0
          %225 = vperm.xlu0 %224, %v215
          %v226 = vpop.permute.xlu0 %225
          %229 = vset.pattern.permute.xlu0 0
          %230 = vperm.xlu0 %229, %v216
          %v231 = vpop.permute.xlu0 %230
          %234 = vset.pattern.permute.xlu0 0
          %235 = vperm.xlu0 %234, %v217
          %v236 = vpop.permute.xlu0 %235
          %vm238 = vcmask 261120
          %v240 = vsel %vm238, %v210, 0
          %v243 = vsel %vm238, %v211, 0
          %v246 = vsel %vm238, %v212, 0
          %v249 = vsel %vm238, %v213, 0
          %251 = vmatprep.subr.mxu0 %v203
          %252 = vmatpush1.msra.mxu0 %v202
          %253 = vmatprep.subr.mxu0 %v205
          %254 = vmatpush1.msra.mxu0 %v204
          %255 = vmatprep.subr.mxu0 %v207
          %256 = vmatpush1.msra.mxu0 %v206
          %257 = vmatprep.subr.mxu0 %v209
          %258 = vmatpush1.msra.mxu0 %v208
          %259 = vmatprep.subr.mxu0 0.0
          %260 = vmatpush1.msra.mxu0 0.0
          %261 = vmatprep.subr.mxu0 0.0
          %262 = vmatpush1.msra.mxu0 0.0
          %263 = vmatprep.subr.mxu0 0.0
          %264 = vmatpush1.msra.mxu0 0.0
          %265 = vmatprep.subr.mxu0 0.0
          %266 = vmatpush1.msra.mxu0 0.0
          %267 = vmatprep.subr.mxu0 0.0
          %268 = vmatpush1.msra.mxu0 0.0
          %269 = vmatprep.subr.mxu0 0.0
          %270 = vmatpush1.msra.mxu0 0.0
          %271 = vmatprep.subr.mxu0 0.0
          %272 = vmatpush1.msra.mxu0 0.0
          %273 = vmatprep.subr.mxu0 0.0
          %274 = vmatpush1.msra.mxu0 0.0
          %275 = vmatprep.subr.mxu0 0.0
          %276 = vmatpush1.msra.mxu0 0.0
          %277 = vmatprep.subr.mxu0 0.0
          %278 = vmatpush1.msra.mxu0 0.0
          %279 = vmatprep.subr.mxu0 0.0
          %280 = vmatpush1.msra.mxu0 0.0
          %281 = vmatprep.subr.mxu0 0.0
          %282 = vmatpush1.msra.mxu0 0.0
          %283 = vmatprep.subr.mxu0 0.0
          %284 = vmatpush1.msra.mxu0 0.0
          %285 = vmatprep.subr.mxu0 0.0
          %286 = vmatpush1.msra.mxu0 0.0
          %287 = vmatprep.subr.mxu0 0.0
          %288 = vmatpush1.msra.mxu0 0.0
          %289 = vmatprep.subr.mxu0 0.0
          %290 = vmatpush1.msra.mxu0 0.0
          %291 = vmatprep.subr.mxu0 0.0
          %292 = vmatpush1.msra.mxu0 0.0
          %293 = vmatprep.subr.mxu0 0.0
          %294 = vmatpush1.msra.mxu0 0.0
          %295 = vmatprep.subr.mxu0 0.0
          %296 = vmatpush1.msra.mxu0 0.0
          %297 = vmatprep.subr.mxu0 0.0
          %298 = vmatpush1.msra.mxu0 0.0
          %299 = vmatprep.subr.mxu0 0.0
          %300 = vmatpush1.msra.mxu0 0.0
          %301 = vmatprep.subr.mxu0 0.0
          %302 = vmatpush1.msra.mxu0 0.0
          %303 = vmatprep.subr.mxu0 0.0
          %304 = vmatpush1.msra.mxu0 0.0
          %305 = vmatprep.subr.mxu0 0.0
          %306 = vmatpush1.msra.mxu0 0.0
          %307 = vmatprep.subr.mxu0 0.0
          %308 = vmatpush1.msra.mxu0 0.0
          %309 = vmatprep.subr.mxu0 0.0
          %310 = vmatpush1.msra.mxu0 0.0
          %311 = vmatprep.subr.mxu0 0.0
          %312 = vmatpush1.msra.mxu0 0.0
          %313 = vmatprep.subr.mxu0 0.0
          %314 = vmatpush1.msra.mxu0 0.0
          %315 = vmatprep.mubr.f32.mxu0 0.0
          %316 = vmatmul.mubr.f32.gmra.mrb[0].mxu0 %v240
          %v317 = vpop.f32.mrb[0].mxu0
          %v318 = vadd.f32 %v221, %v317
          %v319 = vpop.f32.mrb[0].mxu0
          %v320 = vadd.f32 %v221, %v319
          %321 = vmatprep.mubr.f32.mxu0 0.0
          %322 = vmatmul.mubr.f32.gmra.mrb[0].mxu0 %v243
          %v323 = vpop.f32.mrb[0].mxu0
          %v324 = vadd.f32 %v226, %v323
          %v325 = vpop.f32.mrb[0].mxu0
          %v326 = vadd.f32 %v226, %v325
          %327 = vmatprep.mubr.f32.mxu0 0.0
          %328 = vmatmul.mubr.f32.gmra.mrb[0].mxu0 %v246
          %v329 = vpop.f32.mrb[0].mxu0
          %v330 = vadd.f32 %v231, %v329
          %v331 = vpop.f32.mrb[0].mxu0
          %v332 = vadd.f32 %v231, %v331
          %333 = vmatprep.mubr.f32.mxu0 0.0
          %334 = vmatmul.mubr.f32.gmra.mrb[0].mxu0 %v249
          %v335 = vpop.f32.mrb[0].mxu0
          %v336 = vadd.f32 %v236, %v335
          %v337 = vpop.f32.mrb[0].mxu0
          %v338 = vadd.f32 %v236, %v337
          %339 = vdwg.mxu0
          %v340 = vmul.f32 %v318, 0.15915494
          %v341 = vmul.f32 %v320, 0.15915494
          %v342 = vmul.f32 %v324, 0.15915494
          %v343 = vmul.f32 %v326, 0.15915494
          %v344 = vmul.f32 %v330, 0.15915494
          %v345 = vmul.f32 %v332, 0.15915494
          %v346 = vmul.f32 %v336, 0.15915494
          %v347 = vmul.f32 %v338, 0.15915494
          %v348 = vadd.f32 %v340, 0.5
          %v349 = vadd.f32 %v341, 0.5
          %v350 = vadd.f32 %v342, 0.5
          %v351 = vadd.f32 %v343, 0.5
          %v352 = vadd.f32 %v344, 0.5
          %v353 = vadd.f32 %v345, 0.5
          %v354 = vadd.f32 %v346, 0.5
          %v355 = vadd.f32 %v347, 0.5
          %v356 = vfloor.f32 %v348
          %v357 = vfloor.f32 %v349
          %v358 = vfloor.f32 %v350
          %v359 = vfloor.f32 %v351
          %v360 = vfloor.f32 %v352
          %v361 = vfloor.f32 %v353
          %v362 = vfloor.f32 %v354
          %v363 = vfloor.f32 %v355
          %v364 = vsub.f32 %v340, %v356
          %v365 = vsub.f32 %v341, %v357
          %v366 = vsub.f32 %v342, %v358
          %v367 = vsub.f32 %v343, %v359
          %v368 = vsub.f32 %v344, %v360
          %v369 = vsub.f32 %v345, %v361
          %v370 = vsub.f32 %v346, %v362
          %v371 = vsub.f32 %v347, %v363
          %v372 = vmul.f32 %v364, %v364
          %v373 = vmul.f32 %v365, %v365
          %v374 = vmul.f32 %v366, %v366
          %v375 = vmul.f32 %v367, %v367
          %v376 = vmul.f32 %v368, %v368
          %v377 = vmul.f32 %v369, %v369
          %v378 = vmul.f32 %v370, %v370
          %v379 = vmul.f32 %v371, %v371
          %v380 = vmul.f32 %v372, 3.23778
          %v381 = vmul.f32 %v373, 3.23778
          %v382 = vmul.f32 %v374, 3.23778
          %v383 = vmul.f32 %v375, 3.23778
          %v384 = vmul.f32 %v376, 3.23778
          %v385 = vmul.f32 %v377, 3.23778
          %v386 = vmul.f32 %v378, 3.23778
          %v387 = vmul.f32 %v379, 3.23778
          %v388 = vadd.f32 %v380, -14.899578
          %v389 = vadd.f32 %v381, -14.899578
          %v390 = vadd.f32 %v382, -14.899578
          %v391 = vadd.f32 %v383, -14.899578
          %v392 = vadd.f32 %v384, -14.899578
          %v393 = vadd.f32 %v385, -14.899578
          %v394 = vadd.f32 %v386, -14.899578
          %v395 = vadd.f32 %v387, -14.899578
          %v396 = vmul.f32 %v388, %v372
          %v397 = vmul.f32 %v389, %v373
          %v398 = vmul.f32 %v390, %v374
          %v399 = vmul.f32 %v391, %v375
          %v400 = vmul.f32 %v392, %v376
          %v401 = vmul.f32 %v393, %v377
          %v402 = vmul.f32 %v394, %v378
          %v403 = vmul.f32 %v395, %v379
          %v404 = vadd.f32 %v396, 42.025852
          %v405 = vadd.f32 %v397, 42.025852
          %v406 = vadd.f32 %v398, 42.025852
          %v407 = vadd.f32 %v399, 42.025852
          %v408 = vadd.f32 %v400, 42.025852
          %v409 = vadd.f32 %v401, 42.025852
          %v410 = vadd.f32 %v402, 42.025852
          %v411 = vadd.f32 %v403, 42.025852
          %v412 = vmul.f32 %v404, %v372
          %v413 = vmul.f32 %v405, %v373
          %v414 = vmul.f32 %v406, %v374
          %v415 = vmul.f32 %v407, %v375
          %v416 = vmul.f32 %v408, %v376
          %v417 = vmul.f32 %v409, %v377
          %v418 = vmul.f32 %v410, %v378
          %v419 = vmul.f32 %v411, %v379
          %v420 = vadd.f32 %v412, -76.703
          %v421 = vadd.f32 %v413, -76.703
          %v422 = vadd.f32 %v414, -76.703
          %v423 = vadd.f32 %v415, -76.703
          %v424 = vadd.f32 %v416, -76.703
          %v425 = vadd.f32 %v417, -76.703
          %v426 = vadd.f32 %v418, -76.703
          %v427 = vadd.f32 %v419, -76.703
          %v428 = vmul.f32 %v420, %v372
          %v429 = vmul.f32 %v421, %v373
          %v430 = vmul.f32 %v422, %v374
          %v431 = vmul.f32 %v423, %v375
          %v432 = vmul.f32 %v424, %v376
          %v433 = vmul.f32 %v425, %v377
          %v434 = vmul.f32 %v426, %v378
          %v435 = vmul.f32 %v427, %v379
          %v436 = vadd.f32 %v428, 81.60513
          %v437 = vadd.f32 %v429, 81.60513
          %v438 = vadd.f32 %v430, 81.60513
          %v439 = vadd.f32 %v431, 81.60513
          %v440 = vadd.f32 %v432, 81.60513
          %v441 = vadd.f32 %v433, 81.60513
          %v442 = vadd.f32 %v434, 81.60513
          %v443 = vadd.f32 %v435, 81.60513
          %v444 = vmul.f32 %v436, %v372
          %v445 = vmul.f32 %v437, %v373
          %v446 = vmul.f32 %v438, %v374
          %v447 = vmul.f32 %v439, %v375
          %v448 = vmul.f32 %v440, %v376
          %v449 = vmul.f32 %v441, %v377
          %v450 = vmul.f32 %v442, %v378
          %v451 = vmul.f32 %v443, %v379
          %v452 = vadd.f32 %v444, -41.3417
          %v453 = vadd.f32 %v445, -41.3417
          %v454 = vadd.f32 %v446, -41.3417
          %v455 = vadd.f32 %v447, -41.3417
          %v456 = vadd.f32 %v448, -41.3417
          %v457 = vadd.f32 %v449, -41.3417
          %v458 = vadd.f32 %v450, -41.3417
          %v459 = vadd.f32 %v451, -41.3417
          %v460 = vmul.f32 %v452, %v372
          %v461 = vmul.f32 %v453, %v373
          %v462 = vmul.f32 %v454, %v374
          %v463 = vmul.f32 %v455, %v375
          %v464 = vmul.f32 %v456, %v376
          %v465 = vmul.f32 %v457, %v377
          %v466 = vmul.f32 %v458, %v378
          %v467 = vmul.f32 %v459, %v379
          %v468 = vadd.f32 %v460, 6.2831855
          %v469 = vadd.f32 %v461, 6.2831855
          %v470 = vadd.f32 %v462, 6.2831855
          %v471 = vadd.f32 %v463, 6.2831855
          %v472 = vadd.f32 %v464, 6.2831855
          %v473 = vadd.f32 %v465, 6.2831855
          %v474 = vadd.f32 %v466, 6.2831855
          %v475 = vadd.f32 %v467, 6.2831855
          %v476 = vmul.f32 %v364, %v468
          %v477 = vmul.f32 %v365, %v469
          %v478 = vmul.f32 %v366, %v470
          %v479 = vmul.f32 %v367, %v471
          %v480 = vmul.f32 %v368, %v472
          %v481 = vmul.f32 %v369, %v473
          %v482 = vmul.f32 %v370, %v474
          %v483 = vmul.f32 %v371, %v475
          %s484 = scalar_lea.vmem %s1, 32
          %v485 = vld [vmem:[%s484] sm:$0xff]
          %v486 = vld [vmem:[%s484 + $0x8] sm:$0xff]
          %v487 = vld [vmem:[%s484 + $0x10] sm:$0xff]
          %v488 = vld [vmem:[%s484 + $0x18] sm:$0xff]
          %s489 = scalar_lea.vmem %s2, 32
          %v490 = vld [vmem:[%s489] sm:$0xff]
          %v491 = vld [vmem:[%s489 + $0x8] sm:$0xff]
          %v492 = vld [vmem:[%s489 + $0x10] sm:$0xff]
          %v493 = vld [vmem:[%s489 + $0x18] sm:$0xff]
          %495 = vset.pattern.permute.xlu0 0
          %496 = vperm.xlu0 %495, %v490
          %v497 = vpop.permute.xlu0 %496
          %500 = vset.pattern.permute.xlu0 0
          %501 = vperm.xlu0 %500, %v491
          %v502 = vpop.permute.xlu0 %501
          %505 = vset.pattern.permute.xlu0 0
          %506 = vperm.xlu0 %505, %v492
          %v507 = vpop.permute.xlu0 %506
          %510 = vset.pattern.permute.xlu0 0
          %511 = vperm.xlu0 %510, %v493
          %v512 = vpop.permute.xlu0 %511
          %v515 = vsel %vm238, %v485, 0
          %v518 = vsel %vm238, %v486, 0
          %v521 = vsel %vm238, %v487, 0
          %v524 = vsel %vm238, %v488, 0
          %526 = vmatprep.subr.mxu0 %v477
          %527 = vmatpush1.msra.mxu0 %v476
          %528 = vmatprep.subr.mxu0 %v479
          %529 = vmatpush1.msra.mxu0 %v478
          %530 = vmatprep.subr.mxu0 %v481
          %531 = vmatpush1.msra.mxu0 %v480
          %532 = vmatprep.subr.mxu0 %v483
          %533 = vmatpush1.msra.mxu0 %v482
          %534 = vmatprep.subr.mxu0 0.0
          %535 = vmatpush1.msra.mxu0 0.0
          %536 = vmatprep.subr.mxu0 0.0
          %537 = vmatpush1.msra.mxu0 0.0
          %538 = vmatprep.subr.mxu0 0.0
          %539 = vmatpush1.msra.mxu0 0.0
          %540 = vmatprep.subr.mxu0 0.0
          %541 = vmatpush1.msra.mxu0 0.0
          %542 = vmatprep.subr.mxu0 0.0
          %543 = vmatpush1.msra.mxu0 0.0
          %544 = vmatprep.subr.mxu0 0.0
          %545 = vmatpush1.msra.mxu0 0.0
          %546 = vmatprep.subr.mxu0 0.0
          %547 = vmatpush1.msra.mxu0 0.0
          %548 = vmatprep.subr.mxu0 0.0
          %549 = vmatpush1.msra.mxu0 0.0
          %550 = vmatprep.subr.mxu0 0.0
          %551 = vmatpush1.msra.mxu0 0.0
          %552 = vmatprep.subr.mxu0 0.0
          %553 = vmatpush1.msra.mxu0 0.0
          %554 = vmatprep.subr.mxu0 0.0
          %555 = vmatpush1.msra.mxu0 0.0
          %556 = vmatprep.subr.mxu0 0.0
          %557 = vmatpush1.msra.mxu0 0.0
          %558 = vmatprep.subr.mxu0 0.0
          %559 = vmatpush1.msra.mxu0 0.0
          %560 = vmatprep.subr.mxu0 0.0
          %561 = vmatpush1.msra.mxu0 0.0
          %562 = vmatprep.subr.mxu0 0.0
          %563 = vmatpush1.msra.mxu0 0.0
          %564 = vmatprep.subr.mxu0 0.0
          %565 = vmatpush1.msra.mxu0 0.0
          %566 = vmatprep.subr.mxu0 0.0
          %567 = vmatpush1.msra.mxu0 0.0
          %568 = vmatprep.subr.mxu0 0.0
          %569 = vmatpush1.msra.mxu0 0.0
          %570 = vmatprep.subr.mxu0 0.0
          %571 = vmatpush1.msra.mxu0 0.0
          %572 = vmatprep.subr.mxu0 0.0
          %573 = vmatpush1.msra.mxu0 0.0
          %574 = vmatprep.subr.mxu0 0.0
          %575 = vmatpush1.msra.mxu0 0.0
          %576 = vmatprep.subr.mxu0 0.0
          %577 = vmatpush1.msra.mxu0 0.0
          %578 = vmatprep.subr.mxu0 0.0
          %579 = vmatpush1.msra.mxu0 0.0
          %580 = vmatprep.subr.mxu0 0.0
          %581 = vmatpush1.msra.mxu0 0.0
          %582 = vmatprep.subr.mxu0 0.0
          %583 = vmatpush1.msra.mxu0 0.0
          %584 = vmatprep.subr.mxu0 0.0
          %585 = vmatpush1.msra.mxu0 0.0
          %586 = vmatprep.subr.mxu0 0.0
          %587 = vmatpush1.msra.mxu0 0.0
          %588 = vmatprep.subr.mxu0 0.0
          %589 = vmatpush1.msra.mxu0 0.0
          %590 = vmatprep.mubr.f32.mxu0 0.0
          %591 = vmatmul.mubr.f32.gmra.mrb[0].mxu0 %v515
          %v592 = vpop.f32.mrb[0].mxu0
          %v593 = vadd.f32 %v497, %v592
          %v594 = vpop.f32.mrb[0].mxu0
          %v595 = vadd.f32 %v497, %v594
          %596 = vmatprep.mubr.f32.mxu0 0.0
          %597 = vmatmul.mubr.f32.gmra.mrb[0].mxu0 %v518
          %v598 = vpop.f32.mrb[0].mxu0
          %v599 = vadd.f32 %v502, %v598
          %v600 = vpop.f32.mrb[0].mxu0
          %v601 = vadd.f32 %v502, %v600
          %602 = vmatprep.mubr.f32.mxu0 0.0
          %603 = vmatmul.mubr.f32.gmra.mrb[0].mxu0 %v521
          %v604 = vpop.f32.mrb[0].mxu0
          %v605 = vadd.f32 %v507, %v604
          %v606 = vpop.f32.mrb[0].mxu0
          %v607 = vadd.f32 %v507, %v606
          %608 = vmatprep.mubr.f32.mxu0 0.0
          %609 = vmatmul.mubr.f32.gmra.mrb[0].mxu0 %v524
          %v610 = vpop.f32.mrb[0].mxu0
          %v611 = vadd.f32 %v512, %v610
          %v612 = vpop.f32.mrb[0].mxu0
          %v613 = vadd.f32 %v512, %v612
          %614 = vdwg.mxu0
          %v615 = vmul.f32 %v593, 0.15915494
          %v616 = vmul.f32 %v595, 0.15915494
          %v617 = vmul.f32 %v599, 0.15915494
          %v618 = vmul.f32 %v601, 0.15915494
          %v619 = vmul.f32 %v605, 0.15915494
          %v620 = vmul.f32 %v607, 0.15915494
          %v621 = vmul.f32 %v611, 0.15915494
          %v622 = vmul.f32 %v613, 0.15915494
          %v623 = vadd.f32 %v615, 0.5
          %v624 = vadd.f32 %v616, 0.5
          %v625 = vadd.f32 %v617, 0.5
          %v626 = vadd.f32 %v618, 0.5
          %v627 = vadd.f32 %v619, 0.5
          %v628 = vadd.f32 %v620, 0.5
          %v629 = vadd.f32 %v621, 0.5
          %v630 = vadd.f32 %v622, 0.5
          %v631 = vfloor.f32 %v623
          %v632 = vfloor.f32 %v624
          %v633 = vfloor.f32 %v625
          %v634 = vfloor.f32 %v626
          %v635 = vfloor.f32 %v627
          %v636 = vfloor.f32 %v628
          %v637 = vfloor.f32 %v629
          %v638 = vfloor.f32 %v630
          %v639 = vsub.f32 %v615, %v631
          %v640 = vsub.f32 %v616, %v632
          %v641 = vsub.f32 %v617, %v633
          %v642 = vsub.f32 %v618, %v634
          %v643 = vsub.f32 %v619, %v635
          %v644 = vsub.f32 %v620, %v636
          %v645 = vsub.f32 %v621, %v637
          %v646 = vsub.f32 %v622, %v638
          %v647 = vmul.f32 %v639, %v639
          %v648 = vmul.f32 %v640, %v640
          %v649 = vmul.f32 %v641, %v641
          %v650 = vmul.f32 %v642, %v642
          %v651 = vmul.f32 %v643, %v643
          %v652 = vmul.f32 %v644, %v644
          %v653 = vmul.f32 %v645, %v645
          %v654 = vmul.f32 %v646, %v646
          %v655 = vmul.f32 %v647, 3.23778
          %v656 = vmul.f32 %v648, 3.23778
          %v657 = vmul.f32 %v649, 3.23778
          %v658 = vmul.f32 %v650, 3.23778
          %v659 = vmul.f32 %v651, 3.23778
          %v660 = vmul.f32 %v652, 3.23778
          %v661 = vmul.f32 %v653, 3.23778
          %v662 = vmul.f32 %v654, 3.23778
          %v663 = vadd.f32 %v655, -14.899578
          %v664 = vadd.f32 %v656, -14.899578
          %v665 = vadd.f32 %v657, -14.899578
          %v666 = vadd.f32 %v658, -14.899578
          %v667 = vadd.f32 %v659, -14.899578
          %v668 = vadd.f32 %v660, -14.899578
          %v669 = vadd.f32 %v661, -14.899578
          %v670 = vadd.f32 %v662, -14.899578
          %v671 = vmul.f32 %v663, %v647
          %v672 = vmul.f32 %v664, %v648
          %v673 = vmul.f32 %v665, %v649
          %v674 = vmul.f32 %v666, %v650
          %v675 = vmul.f32 %v667, %v651
          %v676 = vmul.f32 %v668, %v652
          %v677 = vmul.f32 %v669, %v653
          %v678 = vmul.f32 %v670, %v654
          %v679 = vadd.f32 %v671, 42.025852
          %v680 = vadd.f32 %v672, 42.025852
          %v681 = vadd.f32 %v673, 42.025852
          %v682 = vadd.f32 %v674, 42.025852
          %v683 = vadd.f32 %v675, 42.025852
          %v684 = vadd.f32 %v676, 42.025852
          %v685 = vadd.f32 %v677, 42.025852
          %v686 = vadd.f32 %v678, 42.025852
          %v687 = vmul.f32 %v679, %v647
          %v688 = vmul.f32 %v680, %v648
          %v689 = vmul.f32 %v681, %v649
          %v690 = vmul.f32 %v682, %v650
          %v691 = vmul.f32 %v683, %v651
          %v692 = vmul.f32 %v684, %v652
          %v693 = vmul.f32 %v685, %v653
          %v694 = vmul.f32 %v686, %v654
          %v695 = vadd.f32 %v687, -76.703
          %v696 = vadd.f32 %v688, -76.703
          %v697 = vadd.f32 %v689, -76.703
          %v698 = vadd.f32 %v690, -76.703
          %v699 = vadd.f32 %v691, -76.703
          %v700 = vadd.f32 %v692, -76.703
          %v701 = vadd.f32 %v693, -76.703
          %v702 = vadd.f32 %v694, -76.703
          %v703 = vmul.f32 %v695, %v647
          %v704 = vmul.f32 %v696, %v648
          %v705 = vmul.f32 %v697, %v649
          %v706 = vmul.f32 %v698, %v650
          %v707 = vmul.f32 %v699, %v651
          %v708 = vmul.f32 %v700, %v652
          %v709 = vmul.f32 %v701, %v653
          %v710 = vmul.f32 %v702, %v654
          %v711 = vadd.f32 %v703, 81.60513
          %v712 = vadd.f32 %v704, 81.60513
          %v713 = vadd.f32 %v705, 81.60513
          %v714 = vadd.f32 %v706, 81.60513
          %v715 = vadd.f32 %v707, 81.60513
          %v716 = vadd.f32 %v708, 81.60513
          %v717 = vadd.f32 %v709, 81.60513
          %v718 = vadd.f32 %v710, 81.60513
          %v719 = vmul.f32 %v711, %v647
          %v720 = vmul.f32 %v712, %v648
          %v721 = vmul.f32 %v713, %v649
          %v722 = vmul.f32 %v714, %v650
          %v723 = vmul.f32 %v715, %v651
          %v724 = vmul.f32 %v716, %v652
          %v725 = vmul.f32 %v717, %v653
          %v726 = vmul.f32 %v718, %v654
          %v727 = vadd.f32 %v719, -41.3417
          %v728 = vadd.f32 %v720, -41.3417
          %v729 = vadd.f32 %v721, -41.3417
          %v730 = vadd.f32 %v722, -41.3417
          %v731 = vadd.f32 %v723, -41.3417
          %v732 = vadd.f32 %v724, -41.3417
          %v733 = vadd.f32 %v725, -41.3417
          %v734 = vadd.f32 %v726, -41.3417
          %v735 = vmul.f32 %v727, %v647
          %v736 = vmul.f32 %v728, %v648
          %v737 = vmul.f32 %v729, %v649
          %v738 = vmul.f32 %v730, %v650
          %v739 = vmul.f32 %v731, %v651
          %v740 = vmul.f32 %v732, %v652
          %v741 = vmul.f32 %v733, %v653
          %v742 = vmul.f32 %v734, %v654
          %v743 = vadd.f32 %v735, 6.2831855
          %v744 = vadd.f32 %v736, 6.2831855
          %v745 = vadd.f32 %v737, 6.2831855
          %v746 = vadd.f32 %v738, 6.2831855
          %v747 = vadd.f32 %v739, 6.2831855
          %v748 = vadd.f32 %v740, 6.2831855
          %v749 = vadd.f32 %v741, 6.2831855
          %v750 = vadd.f32 %v742, 6.2831855
          %v751 = vmul.f32 %v639, %v743
          %v752 = vmul.f32 %v640, %v744
          %v753 = vmul.f32 %v641, %v745
          %v754 = vmul.f32 %v642, %v746
          %v755 = vmul.f32 %v643, %v747
          %v756 = vmul.f32 %v644, %v748
          %v757 = vmul.f32 %v645, %v749
          %v758 = vmul.f32 %v646, %v750
          %s759 = scalar_lea.vmem %s1, 64
          %v760 = vld [vmem:[%s759] sm:$0xff]
          %v761 = vld [vmem:[%s759 + $0x8] sm:$0xff]
          %v762 = vld [vmem:[%s759 + $0x10] sm:$0xff]
          %v763 = vld [vmem:[%s759 + $0x18] sm:$0xff]
          %s764 = scalar_lea.vmem %s2, 64
          %v765 = vld [vmem:[%s764] sm:$0xff]
          %v766 = vld [vmem:[%s764 + $0x8] sm:$0xff]
          %v767 = vld [vmem:[%s764 + $0x10] sm:$0xff]
          %v768 = vld [vmem:[%s764 + $0x18] sm:$0xff]
          %770 = vset.pattern.permute.xlu0 0
          %771 = vperm.xlu0 %770, %v765
          %v772 = vpop.permute.xlu0 %771
          %775 = vset.pattern.permute.xlu0 0
          %776 = vperm.xlu0 %775, %v766
          %v777 = vpop.permute.xlu0 %776
          %780 = vset.pattern.permute.xlu0 0
          %781 = vperm.xlu0 %780, %v767
          %v782 = vpop.permute.xlu0 %781
          %785 = vset.pattern.permute.xlu0 0
          %786 = vperm.xlu0 %785, %v768
          %v787 = vpop.permute.xlu0 %786
          %v790 = vsel %vm238, %v760, 0
          %v793 = vsel %vm238, %v761, 0
          %v796 = vsel %vm238, %v762, 0
          %v799 = vsel %vm238, %v763, 0
          %801 = vmatprep.subr.mxu0 %v752
          %802 = vmatpush1.msra.mxu0 %v751
          %803 = vmatprep.subr.mxu0 %v754
          %804 = vmatpush1.msra.mxu0 %v753
          %805 = vmatprep.subr.mxu0 %v756
          %806 = vmatpush1.msra.mxu0 %v755
          %807 = vmatprep.subr.mxu0 %v758
          %808 = vmatpush1.msra.mxu0 %v757
          %809 = vmatprep.subr.mxu0 0.0
          %810 = vmatpush1.msra.mxu0 0.0
          %811 = vmatprep.subr.mxu0 0.0
          %812 = vmatpush1.msra.mxu0 0.0
          %813 = vmatprep.subr.mxu0 0.0
          %814 = vmatpush1.msra.mxu0 0.0
          %815 = vmatprep.subr.mxu0 0.0
          %816 = vmatpush1.msra.mxu0 0.0
          %817 = vmatprep.subr.mxu0 0.0
          %818 = vmatpush1.msra.mxu0 0.0
          %819 = vmatprep.subr.mxu0 0.0
          %820 = vmatpush1.msra.mxu0 0.0
          %821 = vmatprep.subr.mxu0 0.0
          %822 = vmatpush1.msra.mxu0 0.0
          %823 = vmatprep.subr.mxu0 0.0
          %824 = vmatpush1.msra.mxu0 0.0
          %825 = vmatprep.subr.mxu0 0.0
          %826 = vmatpush1.msra.mxu0 0.0
          %827 = vmatprep.subr.mxu0 0.0
          %828 = vmatpush1.msra.mxu0 0.0
          %829 = vmatprep.subr.mxu0 0.0
          %830 = vmatpush1.msra.mxu0 0.0
          %831 = vmatprep.subr.mxu0 0.0
          %832 = vmatpush1.msra.mxu0 0.0
          %833 = vmatprep.subr.mxu0 0.0
          %834 = vmatpush1.msra.mxu0 0.0
          %835 = vmatprep.subr.mxu0 0.0
          %836 = vmatpush1.msra.mxu0 0.0
          %837 = vmatprep.subr.mxu0 0.0
          %838 = vmatpush1.msra.mxu0 0.0
          %839 = vmatprep.subr.mxu0 0.0
          %840 = vmatpush1.msra.mxu0 0.0
          %841 = vmatprep.subr.mxu0 0.0
          %842 = vmatpush1.msra.mxu0 0.0
          %843 = vmatprep.subr.mxu0 0.0
          %844 = vmatpush1.msra.mxu0 0.0
          %845 = vmatprep.subr.mxu0 0.0
          %846 = vmatpush1.msra.mxu0 0.0
          %847 = vmatprep.subr.mxu0 0.0
          %848 = vmatpush1.msra.mxu0 0.0
          %849 = vmatprep.subr.mxu0 0.0
          %850 = vmatpush1.msra.mxu0 0.0
          %851 = vmatprep.subr.mxu0 0.0
          %852 = vmatpush1.msra.mxu0 0.0
          %853 = vmatprep.subr.mxu0 0.0
          %854 = vmatpush1.msra.mxu0 0.0
          %855 = vmatprep.subr.mxu0 0.0
          %856 = vmatpush1.msra.mxu0 0.0
          %857 = vmatprep.subr.mxu0 0.0
          %858 = vmatpush1.msra.mxu0 0.0
          %859 = vmatprep.subr.mxu0 0.0
          %860 = vmatpush1.msra.mxu0 0.0
          %861 = vmatprep.subr.mxu0 0.0
          %862 = vmatpush1.msra.mxu0 0.0
          %863 = vmatprep.subr.mxu0 0.0
          %864 = vmatpush1.msra.mxu0 0.0
          %865 = vmatprep.mubr.f32.mxu0 0.0
          %866 = vmatmul.mubr.f32.gmra.mrb[0].mxu0 %v790
          %v867 = vpop.f32.mrb[0].mxu0
          %v868 = vadd.f32 %v772, %v867
          %v869 = vpop.f32.mrb[0].mxu0
          %v870 = vadd.f32 %v772, %v869
          %871 = vmatprep.mubr.f32.mxu0 0.0
          %872 = vmatmul.mubr.f32.gmra.mrb[0].mxu0 %v793
          %v873 = vpop.f32.mrb[0].mxu0
          %v874 = vadd.f32 %v777, %v873
          %v875 = vpop.f32.mrb[0].mxu0
          %v876 = vadd.f32 %v777, %v875
          %877 = vmatprep.mubr.f32.mxu0 0.0
          %878 = vmatmul.mubr.f32.gmra.mrb[0].mxu0 %v796
          %v879 = vpop.f32.mrb[0].mxu0
          %v880 = vadd.f32 %v782, %v879
          %v881 = vpop.f32.mrb[0].mxu0
          %v882 = vadd.f32 %v782, %v881
          %883 = vmatprep.mubr.f32.mxu0 0.0
          %884 = vmatmul.mubr.f32.gmra.mrb[0].mxu0 %v799
          %v885 = vpop.f32.mrb[0].mxu0
          %v886 = vadd.f32 %v787, %v885
          %v887 = vpop.f32.mrb[0].mxu0
          %v888 = vadd.f32 %v787, %v887
          %889 = vdwg.mxu0
          %v890 = vmul.f32 %v868, 0.15915494
          %v891 = vmul.f32 %v870, 0.15915494
          %v892 = vmul.f32 %v874, 0.15915494
          %v893 = vmul.f32 %v876, 0.15915494
          %v894 = vmul.f32 %v880, 0.15915494
          %v895 = vmul.f32 %v882, 0.15915494
          %v896 = vmul.f32 %v886, 0.15915494
          %v897 = vmul.f32 %v888, 0.15915494
          %v898 = vadd.f32 %v890, 0.5
          %v899 = vadd.f32 %v891, 0.5
          %v900 = vadd.f32 %v892, 0.5
          %v901 = vadd.f32 %v893, 0.5
          %v902 = vadd.f32 %v894, 0.5
          %v903 = vadd.f32 %v895, 0.5
          %v904 = vadd.f32 %v896, 0.5
          %v905 = vadd.f32 %v897, 0.5
          %v906 = vfloor.f32 %v898
          %v907 = vfloor.f32 %v899
          %v908 = vfloor.f32 %v900
          %v909 = vfloor.f32 %v901
          %v910 = vfloor.f32 %v902
          %v911 = vfloor.f32 %v903
          %v912 = vfloor.f32 %v904
          %v913 = vfloor.f32 %v905
          %v914 = vsub.f32 %v890, %v906
          %v915 = vsub.f32 %v891, %v907
          %v916 = vsub.f32 %v892, %v908
          %v917 = vsub.f32 %v893, %v909
          %v918 = vsub.f32 %v894, %v910
          %v919 = vsub.f32 %v895, %v911
          %v920 = vsub.f32 %v896, %v912
          %v921 = vsub.f32 %v897, %v913
          %v922 = vmul.f32 %v914, %v914
          %v923 = vmul.f32 %v915, %v915
          %v924 = vmul.f32 %v916, %v916
          %v925 = vmul.f32 %v917, %v917
          %v926 = vmul.f32 %v918, %v918
          %v927 = vmul.f32 %v919, %v919
          %v928 = vmul.f32 %v920, %v920
          %v929 = vmul.f32 %v921, %v921
          %v930 = vmul.f32 %v922, 3.23778
          %v931 = vmul.f32 %v923, 3.23778
          %v932 = vmul.f32 %v924, 3.23778
          %v933 = vmul.f32 %v925, 3.23778
          %v934 = vmul.f32 %v926, 3.23778
          %v935 = vmul.f32 %v927, 3.23778
          %v936 = vmul.f32 %v928, 3.23778
          %v937 = vmul.f32 %v929, 3.23778
          %v938 = vadd.f32 %v930, -14.899578
          %v939 = vadd.f32 %v931, -14.899578
          %v940 = vadd.f32 %v932, -14.899578
          %v941 = vadd.f32 %v933, -14.899578
          %v942 = vadd.f32 %v934, -14.899578
          %v943 = vadd.f32 %v935, -14.899578
          %v944 = vadd.f32 %v936, -14.899578
          %v945 = vadd.f32 %v937, -14.899578
          %v946 = vmul.f32 %v938, %v922
          %v947 = vmul.f32 %v939, %v923
          %v948 = vmul.f32 %v940, %v924
          %v949 = vmul.f32 %v941, %v925
          %v950 = vmul.f32 %v942, %v926
          %v951 = vmul.f32 %v943, %v927
          %v952 = vmul.f32 %v944, %v928
          %v953 = vmul.f32 %v945, %v929
          %v954 = vadd.f32 %v946, 42.025852
          %v955 = vadd.f32 %v947, 42.025852
          %v956 = vadd.f32 %v948, 42.025852
          %v957 = vadd.f32 %v949, 42.025852
          %v958 = vadd.f32 %v950, 42.025852
          %v959 = vadd.f32 %v951, 42.025852
          %v960 = vadd.f32 %v952, 42.025852
          %v961 = vadd.f32 %v953, 42.025852
          %v962 = vmul.f32 %v954, %v922
          %v963 = vmul.f32 %v955, %v923
          %v964 = vmul.f32 %v956, %v924
          %v965 = vmul.f32 %v957, %v925
          %v966 = vmul.f32 %v958, %v926
          %v967 = vmul.f32 %v959, %v927
          %v968 = vmul.f32 %v960, %v928
          %v969 = vmul.f32 %v961, %v929
          %v970 = vadd.f32 %v962, -76.703
          %v971 = vadd.f32 %v963, -76.703
          %v972 = vadd.f32 %v964, -76.703
          %v973 = vadd.f32 %v965, -76.703
          %v974 = vadd.f32 %v966, -76.703
          %v975 = vadd.f32 %v967, -76.703
          %v976 = vadd.f32 %v968, -76.703
          %v977 = vadd.f32 %v969, -76.703
          %v978 = vmul.f32 %v970, %v922
          %v979 = vmul.f32 %v971, %v923
          %v980 = vmul.f32 %v972, %v924
          %v981 = vmul.f32 %v973, %v925
          %v982 = vmul.f32 %v974, %v926
          %v983 = vmul.f32 %v975, %v927
          %v984 = vmul.f32 %v976, %v928
          %v985 = vmul.f32 %v977, %v929
          %v986 = vadd.f32 %v978, 81.60513
          %v987 = vadd.f32 %v979, 81.60513
          %v988 = vadd.f32 %v980, 81.60513
          %v989 = vadd.f32 %v981, 81.60513
          %v990 = vadd.f32 %v982, 81.60513
          %v991 = vadd.f32 %v983, 81.60513
          %v992 = vadd.f32 %v984, 81.60513
          %v993 = vadd.f32 %v985, 81.60513
          %v994 = vmul.f32 %v986, %v922
          %v995 = vmul.f32 %v987, %v923
          %v996 = vmul.f32 %v988, %v924
          %v997 = vmul.f32 %v989, %v925
          %v998 = vmul.f32 %v990, %v926
          %v999 = vmul.f32 %v991, %v927
          %v1000 = vmul.f32 %v992, %v928
          %v1001 = vmul.f32 %v993, %v929
          %v1002 = vadd.f32 %v994, -41.3417
          %v1003 = vadd.f32 %v995, -41.3417
          %v1004 = vadd.f32 %v996, -41.3417
          %v1005 = vadd.f32 %v997, -41.3417
          %v1006 = vadd.f32 %v998, -41.3417
          %v1007 = vadd.f32 %v999, -41.3417
          %v1008 = vadd.f32 %v1000, -41.3417
          %v1009 = vadd.f32 %v1001, -41.3417
          %v1010 = vmul.f32 %v1002, %v922
          %v1011 = vmul.f32 %v1003, %v923
          %v1012 = vmul.f32 %v1004, %v924
          %v1013 = vmul.f32 %v1005, %v925
          %v1014 = vmul.f32 %v1006, %v926
          %v1015 = vmul.f32 %v1007, %v927
          %v1016 = vmul.f32 %v1008, %v928
          %v1017 = vmul.f32 %v1009, %v929
          %v1018 = vadd.f32 %v1010, 6.2831855
          %v1019 = vadd.f32 %v1011, 6.2831855
          %v1020 = vadd.f32 %v1012, 6.2831855
          %v1021 = vadd.f32 %v1013, 6.2831855
          %v1022 = vadd.f32 %v1014, 6.2831855
          %v1023 = vadd.f32 %v1015, 6.2831855
          %v1024 = vadd.f32 %v1016, 6.2831855
          %v1025 = vadd.f32 %v1017, 6.2831855
          %v1026 = vmul.f32 %v914, %v1018
          %v1027 = vmul.f32 %v915, %v1019
          %v1028 = vmul.f32 %v916, %v1020
          %v1029 = vmul.f32 %v917, %v1021
          %v1030 = vmul.f32 %v918, %v1022
          %v1031 = vmul.f32 %v919, %v1023
          %v1032 = vmul.f32 %v920, %v1024
          %v1033 = vmul.f32 %v921, %v1025
          %s1034 = scalar_lea.vmem %s1, 96
          %v1035 = vld [vmem:[%s1034] sm:$0x1]
          %s1036 = scalar_lea.vmem %s2, 96
          %v1037 = vld [vmem:[%s1036] sm:$0x1]
          %1039 = vset.pattern.permute.xlu0 0
          %1040 = vperm.xlu0 %1039, %v1037
          %v1041 = vpop.permute.xlu0 %1040
          %v1044 = vsel %vm238, %v1035, 0
          %1046 = vmatprep.subr.mxu0 %v1027
          %1047 = vmatpush1.msra.mxu0 %v1026
          %1048 = vmatprep.subr.mxu0 %v1029
          %1049 = vmatpush1.msra.mxu0 %v1028
          %1050 = vmatprep.subr.mxu0 %v1031
          %1051 = vmatpush1.msra.mxu0 %v1030
          %1052 = vmatprep.subr.mxu0 %v1033
          %1053 = vmatpush1.msra.mxu0 %v1032
          %1054 = vmatprep.subr.mxu0 0.0
          %1055 = vmatpush1.msra.mxu0 0.0
          %1056 = vmatprep.subr.mxu0 0.0
          %1057 = vmatpush1.msra.mxu0 0.0
          %1058 = vmatprep.subr.mxu0 0.0
          %1059 = vmatpush1.msra.mxu0 0.0
          %1060 = vmatprep.subr.mxu0 0.0
          %1061 = vmatpush1.msra.mxu0 0.0
          %1062 = vmatprep.subr.mxu0 0.0
          %1063 = vmatpush1.msra.mxu0 0.0
          %1064 = vmatprep.subr.mxu0 0.0
          %1065 = vmatpush1.msra.mxu0 0.0
          %1066 = vmatprep.subr.mxu0 0.0
          %1067 = vmatpush1.msra.mxu0 0.0
          %1068 = vmatprep.subr.mxu0 0.0
          %1069 = vmatpush1.msra.mxu0 0.0
          %1070 = vmatprep.subr.mxu0 0.0
          %1071 = vmatpush1.msra.mxu0 0.0
          %1072 = vmatprep.subr.mxu0 0.0
          %1073 = vmatpush1.msra.mxu0 0.0
          %1074 = vmatprep.subr.mxu0 0.0
          %1075 = vmatpush1.msra.mxu0 0.0
          %1076 = vmatprep.subr.mxu0 0.0
          %1077 = vmatpush1.msra.mxu0 0.0
          %1078 = vmatprep.subr.mxu0 0.0
          %1079 = vmatpush1.msra.mxu0 0.0
          %1080 = vmatprep.subr.mxu0 0.0
          %1081 = vmatpush1.msra.mxu0 0.0
          %1082 = vmatprep.subr.mxu0 0.0
          %1083 = vmatpush1.msra.mxu0 0.0
          %1084 = vmatprep.subr.mxu0 0.0
          %1085 = vmatpush1.msra.mxu0 0.0
          %1086 = vmatprep.subr.mxu0 0.0
          %1087 = vmatpush1.msra.mxu0 0.0
          %1088 = vmatprep.subr.mxu0 0.0
          %1089 = vmatpush1.msra.mxu0 0.0
          %1090 = vmatprep.subr.mxu0 0.0
          %1091 = vmatpush1.msra.mxu0 0.0
          %1092 = vmatprep.subr.mxu0 0.0
          %1093 = vmatpush1.msra.mxu0 0.0
          %1094 = vmatprep.subr.mxu0 0.0
          %1095 = vmatpush1.msra.mxu0 0.0
          %1096 = vmatprep.subr.mxu0 0.0
          %1097 = vmatpush1.msra.mxu0 0.0
          %1098 = vmatprep.subr.mxu0 0.0
          %1099 = vmatpush1.msra.mxu0 0.0
          %1100 = vmatprep.subr.mxu0 0.0
          %1101 = vmatpush1.msra.mxu0 0.0
          %1102 = vmatprep.subr.mxu0 0.0
          %1103 = vmatpush1.msra.mxu0 0.0
          %1104 = vmatprep.subr.mxu0 0.0
          %1105 = vmatpush1.msra.mxu0 0.0
          %1106 = vmatprep.subr.mxu0 0.0
          %1107 = vmatpush1.msra.mxu0 0.0
          %1108 = vmatprep.subr.mxu0 0.0
          %1109 = vmatpush1.msra.mxu0 0.0
          %1110 = vmatprep.mubr.f32.mxu0 0.0
          %1111 = vmatmul.mubr.f32.gmra.mrb[0].mxu0 %v1044
          %v1112 = vpop.f32.mrb[0].mxu0
          %v1113 = vadd.f32 %v1041, %v1112
          %v1114 = vpop.f32.mrb[0].mxu0
          %v1115 = vadd.f32 %v1041, %v1114
          %1116 = vdwg.mxu0
          %v1117 = vmul.f32 %v1113, 0.15915494
          %v1118 = vmul.f32 %v1115, 0.15915494
          %v1119 = vadd.f32 %v1117, 0.5
          %v1120 = vadd.f32 %v1118, 0.5
          %v1121 = vfloor.f32 %v1119
          %v1122 = vfloor.f32 %v1120
          %v1123 = vsub.f32 %v1117, %v1121
          %v1124 = vsub.f32 %v1118, %v1122
          %v1125 = vmul.f32 %v1123, %v1123
          %v1126 = vmul.f32 %v1124, %v1124
          %v1127 = vmul.f32 %v1125, 3.23778
          %v1128 = vmul.f32 %v1126, 3.23778
          %v1129 = vadd.f32 %v1127, -14.899578
          %v1130 = vadd.f32 %v1128, -14.899578
          %v1131 = vmul.f32 %v1129, %v1125
          %v1132 = vmul.f32 %v1130, %v1126
          %v1133 = vadd.f32 %v1131, 42.025852
          %v1134 = vadd.f32 %v1132, 42.025852
          %v1135 = vmul.f32 %v1133, %v1125
          %v1136 = vmul.f32 %v1134, %v1126
          %v1137 = vadd.f32 %v1135, -76.703
          %v1138 = vadd.f32 %v1136, -76.703
          %v1139 = vmul.f32 %v1137, %v1125
          %v1140 = vmul.f32 %v1138, %v1126
          %v1141 = vadd.f32 %v1139, 81.60513
          %v1142 = vadd.f32 %v1140, 81.60513
          %v1143 = vmul.f32 %v1141, %v1125
          %v1144 = vmul.f32 %v1142, %v1126
          %v1145 = vadd.f32 %v1143, -41.3417
          %v1146 = vadd.f32 %v1144, -41.3417
          %v1147 = vmul.f32 %v1145, %v1125
          %v1148 = vmul.f32 %v1146, %v1126
          %v1149 = vadd.f32 %v1147, 6.2831855
          %v1150 = vadd.f32 %v1148, 6.2831855
          %v1151 = vmul.f32 %v1123, %v1149
          %v1152 = vmul.f32 %v1124, %v1150
          %v1155 = vcombine.low %v1151, %v1152
          %v1157 = vunpack.c.l.s4 1966171168
          %v1158 = vunpack.c.0.s8 %v1157
          %v1159 = vlaneseq
          %v1160 = vshrl.u32 %v1159, 7
          %v1161 = vsub.s32 %v1158, %v1160
          %v1162 = vrot.slane %v1155, %v1161
          %v1164 = vunpack.c.l.s4 1966171168
          %v1165 = vunpack.c.0.s8 %v1164
          %v1166 = vlaneseq
          %v1167 = vshrl.u32 %v1166, 7
          %v1168 = vsub.s32 %v1165, %v1167
          %v1169 = vrot.slane %v1162, %v1168
          %s1171 = scalar_lea.vmem %s188, %s198 [#allocation5]
          %v1172 = vlaneseq
          %vm1173 = vcmp.ge.s32.totalorder %v1172, 0
          %vm1174 = vcmp.lt.s32.totalorder %v1172, 256
          %vm1175 = vmand %vm1173, %vm1174
          %1176 = vst.msk [vmem:[%s1171] sm:$0x3] %vm1175, %v1169
        $region41: #{tpu_custom_call.1} parent=31 // loop_footer
          %s196 = sadd.s32 1, %s192
        $region42: #{tpu_custom_call.1} parent=31 // loop_footer_branch
          %191 = sbr.rel target = $region38
        $region43: #{tpu_custom_call.1} parent=31 // loop_exit
          _
        %s1177 = sand.u32 %s96, 1
        %s1178 = scalar_lea.sflag [#allocation4], %s1177
        %s1179 = sand.u32 %s96, 1
        %s1180 = smul.addr %s1179, 12
        %s1181 = scalar_lea.vmem [#allocation5], %s1180
        // Predicated region
        $region44: #{tpu_custom_call.1} parent=31 // pred_check
          %p1182 = pneg %p106
        $region45: #{tpu_custom_call.1} parent=31 // pred_check_branch
          %1184 = sbr.rel (%p1182) target = $region47
        $region46: #{tpu_custom_call.1} parent=31 // pred_region
          %s1185 = smul.u32 12, %s20
          %s1187 = ssub.s32 192, 192
          %1188 = vsyncadd %s1178, %s1187
          %s1189 = smul.addr %s1185, 16
          %s1190 = scalar_lea.hbm %s3, %s1189
          %s1192 = sshll.u32 %s1181, 4
          %s1193 = int_to_ptr.vmem [resolvable:$true] %s1192
          %1195 = dma.vmem_to_hbm [thread:$0]  %s1193, 192, %s1190, %s1178
        $region47: #{tpu_custom_call.1} parent=31 // pred_fallthru
          _
      $region32: #{tpu_custom_call.1} parent=5 // pred_fallthru
        _
      %p1196 = scmp.le.s32.totalorder 2, %s15
      // Predicated region
      $region48: #{tpu_custom_call.1} parent=5 // pred_check
        %p1197 = pneg %p1196
      $region49: #{tpu_custom_call.1} parent=5 // pred_check_branch
        %1199 = sbr.rel (%p1197) target = $region51
      $region50: #{tpu_custom_call.1} parent=5 // pred_region
        %s1200 = ssub.s32 %s15, 2
        // Predicated region
        $region52: #{tpu_custom_call.1} parent=50 // pred_check
          %p1201 = pneg %p112
        $region53: #{tpu_custom_call.1} parent=50 // pred_check_branch
          %1203 = sbr.rel (%p1201) target = $region55
        $region54: #{tpu_custom_call.1} parent=50 // pred_region
          %s1204 = sand.u32 %s97, 1
          %s1205 = scalar_lea.sflag [#allocation4], %s1204
          %s1206 = sand.u32 %s97, 1
          %s1207 = smul.addr %s1206, 12
          %s1208 = scalar_lea.vmem [#allocation5], %s1207
          %1209 = dma.done %s1205, 192
        $region55: #{tpu_custom_call.1} parent=50 // pred_fallthru
          _
      $region51: #{tpu_custom_call.1} parent=5 // pred_fallthru
        _
    $region6: #{tpu_custom_call.1} parent=1 // loop_footer
      %s19 = sadd.s32 1, %s15
    $region7: #{tpu_custom_call.1} parent=1 // loop_footer_branch
      %14 = sbr.rel target = $region3
    $region8: #{tpu_custom_call.1} parent=1 // loop_exit
      _
    %1210 = vsyncpa [#allocation3], 1
    %s1211 = scalar_lea.sflag [#allocation3], 1
    %1212 = vsyncpa %s1211, 1
    %1213 = vsyncpa [#allocation4], 1
    %s1214 = scalar_lea.sflag [#allocation4], 1
    %1215 = vsyncpa %s1214, 1

</llo_original>
